<compile_context>
chip_gen: v7x
topology: tpu7x:2x2x1
jax: 0.10.0
libtpu: 0.0.40
codegen_flags: <defaults>
</compile_context>

<pallas_src>
import functools

import jax
import jax.numpy as jnp
from jax.experimental import pallas as pl
from jax.experimental.pallas import tpu as pltpu


_LANE = 128
_COMPUTE_DTYPE = jnp.bfloat16  # MXU operand dtype; accumulation stays f32.


def _round_up(x, m):
    return (x + m - 1) // m * m


def _vmem_budget_bytes():
    """Usable VMEM for this chip generation (capacity minus headroom)."""
    cap = None
    try:
        cap = getattr(pltpu.get_tpu_info(), "vmem_capacity_bytes", None)
    except Exception:
        cap = None
    if not cap:
        cap = 64 * 1024 * 1024  # conservative default (v7x-sized VMEM)
    return max(cap - 16 * 1024 * 1024, 16 * 1024 * 1024)


# ---------------------------------------------------------------------------
# Fused single-block kernel: whole problem VMEM-resident.
# ---------------------------------------------------------------------------
def _sgc_fused_kernel(adj_ref, x_ref, w_ref, b_ref, o_ref, *, k: int):
    # adj: [Np, Np] bf16, x: [Np, Dip] bf16, w: [Dip, Dop] bf16,
    # b: [1, Dop] f32, o: [Np, Dop] f32
    s = adj_ref[...]
    # Project through W first (S^k (X W) == (S^k X) W).
    h = jnp.dot(x_ref[...], w_ref[...], preferred_element_type=jnp.float32)
    # k-step propagation; k is a small static constant, so the unrolled chain
    # keeps at most ~2 [Np, Dop] intermediates live (accounted for in the
    # VMEM estimate below).
    for _ in range(k):
        h = jnp.dot(s, h.astype(s.dtype), preferred_element_type=jnp.float32)
    o_ref[...] = (h + b_ref[...]).astype(o_ref.dtype)


# ---------------------------------------------------------------------------
# Tiled / S-streaming kernels for graphs too large to hold S in VMEM.
# ---------------------------------------------------------------------------
def _project_kernel(x_ref, w_ref, o_ref):
    # x: [tm, Dip] bf16, w: [Dip, Dop] bf16, o: [tm, Dop] bf16
    o_ref[...] = jnp.dot(
        x_ref[...], w_ref[...], preferred_element_type=jnp.float32
    ).astype(o_ref.dtype)


def _propagate_kernel(adj_ref, h_ref, b_ref, o_ref, *, add_bias: bool):
    # adj: [tm, Np] bf16 row panel (streamed from HBM per grid step),
    # h:   [Np, Dop] bf16 (same block every step -> stays VMEM-resident),
    # b:   [1, Dop] f32, o: [tm, Dop]
    acc = jnp.dot(adj_ref[...], h_ref[...], preferred_element_type=jnp.float32)
    if add_bias:
        acc = acc + b_ref[...]
    o_ref[...] = acc.astype(o_ref.dtype)


# ---------------------------------------------------------------------------
# Wrappers.
# ---------------------------------------------------------------------------
def _fused_vmem_bytes(np_, dip, dop):
    bf16, f32 = 2, 4
    return (
        np_ * np_ * bf16          # S
        + np_ * dip * bf16        # X
        + dip * dop * bf16        # W
        + 8 * dop * f32           # bias (sublane-padded)
        + np_ * dop * f32         # output
        + 3 * np_ * dop * f32     # live dot intermediates / bf16 recasts
        + (1 << 20)               # compiler scratch slack
    )


def _sgc_fused(adj_p, x_p, w_p, b_p, k, out_dtype, vmem_limit):
    np_, dip = x_p.shape
    dop = w_p.shape[1]
    cost = pl.CostEstimate(
        flops=2 * np_ * dip * dop + 2 * k * np_ * np_ * dop,
        transcendentals=0,
        bytes_accessed=(adj_p.size + x_p.size + w_p.size) * 2
        + b_p.size * 4 + np_ * dop * 4,
    )
    return pl.pallas_call(
        functools.partial(_sgc_fused_kernel, k=k),
        out_shape=jax.ShapeDtypeStruct((np_, dop), out_dtype),
        in_specs=[pl.BlockSpec(memory_space=pltpu.MemorySpace.VMEM)] * 4,
        out_specs=pl.BlockSpec(memory_space=pltpu.MemorySpace.VMEM),
        compiler_params=pltpu.CompilerParams(vmem_limit_bytes=vmem_limit),
        cost_estimate=cost,
    )(adj_p, x_p, w_p, b_p)


def _pick_row_tile(np_, dip, dop, budget):
    # Prefer 256/512-row tiles (full 256-wide MXU passes on v6e/v7x); 128 is
    # native on v5e and the safe fallback.
    for tm in (512, 256, 128):
        if np_ % tm:
            continue
        need = (
            2 * tm * np_ * 2      # S row panels (double-buffered, bf16)
            + np_ * dop * 2       # resident h (bf16)
            + 2 * tm * dop * 4    # output tiles (double-buffered)
            + 2 * tm * dip * 2    # X tiles (projection pass)
            + dip * dop * 2       # W
            + (1 << 20)
        )
        if need <= budget:
            return tm
    return 128


def _sgc_tiled(adj_p, x_p, w_p, b_p, k, out_dtype, vmem_limit, tm):
    np_, dip = x_p.shape
    dop = w_p.shape[1]
    nt = np_ // tm
    cparams = pltpu.CompilerParams(
        dimension_semantics=("parallel",),  # shard row tiles across 2 TCs (v7x)
        vmem_limit_bytes=vmem_limit,
    )

    # 1) Projection: h0 = X @ W (bf16 intermediate for the propagation loop).
    h = pl.pallas_call(
        _project_kernel,
        out_shape=jax.ShapeDtypeStruct((np_, dop), _COMPUTE_DTYPE),
        grid=(nt,),
        in_specs=[
            pl.BlockSpec((tm, dip), lambda i: (i, 0)),
            pl.BlockSpec((dip, dop), lambda i: (0, 0)),
        ],
        out_specs=pl.BlockSpec((tm, dop), lambda i: (i, 0)),
        compiler_params=cparams,
        cost_estimate=pl.CostEstimate(
            flops=2 * np_ * dip * dop,
            transcendentals=0,
            bytes_accessed=np_ * dip * 2 + dip * dop * 2 + np_ * dop * 2,
        ),
    )(x_p, w_p)

    # 2) k propagation passes: each streams the row panels of S from HBM once
    #    (HBM-BW bound, bf16 halves the traffic) while h stays VMEM-resident.
    prop_cost = pl.CostEstimate(
        flops=2 * np_ * np_ * dop,
        transcendentals=0,
        bytes_accessed=np_ * np_ * 2 + np_ * dop * 2 + np_ * dop * 4,
    )
    for step in range(k):
        last = step == k - 1
        h = pl.pallas_call(
            functools.partial(_propagate_kernel, add_bias=last),
            out_shape=jax.ShapeDtypeStruct(
                (np_, dop), out_dtype if last else _COMPUTE_DTYPE
            ),
            grid=(nt,),
            in_specs=[
                pl.BlockSpec((tm, np_), lambda i: (i, 0)),
                pl.BlockSpec((np_, dop), lambda i: (0, 0)),
                pl.BlockSpec((1, dop), lambda i: (0, 0)),
            ],
            out_specs=pl.BlockSpec((tm, dop), lambda i: (i, 0)),
            compiler_params=cparams,
            cost_estimate=prop_cost,
        )(adj_p, h, b_p)
    return h


def sgc_forward(adj_norm, feat, w, b, k: int, *, force_tiled: bool = False):
    """Fused SGC forward.

    adj_norm: [N, N]  dense normalized adjacency S = D^-1/2 A D^-1/2
    feat:     [N, in_dim]
    w:        [in_dim, out_dim]  (pre-transposed vs. PyTorch nn.Linear weight)
    b:        [out_dim]
    """
    n, d_in = feat.shape
    assert adj_norm.shape == (n, n)
    d_in_w, d_out = w.shape
    assert d_in == d_in_w

    np_ = _round_up(n, _LANE)
    dip = _round_up(d_in, _LANE)
    dop = _round_up(d_out, _LANE)
    cd = _COMPUTE_DTYPE

    # Zero-pad lane dims to 128 multiples and cast MXU operands to bf16
    # (skip the pad copy when already aligned).
    # TODO(synk): for very large S, DMA the [:n, :n] region straight into a
    # zero-initialized buffer instead of materializing a padded HBM copy.
    def pad2(a, r, c, dt):
        if a.shape == (r, c):
            return a.astype(dt)
        return jnp.zeros((r, c), dt).at[: a.shape[0], : a.shape[1]].set(a.astype(dt))

    adj_p = pad2(adj_norm, np_, np_, cd)
    x_p = pad2(feat, np_, dip, cd)
    w_p = pad2(w, dip, dop, cd)
    b_p = pad2(b.reshape(1, -1), 1, dop, jnp.float32)

    budget = _vmem_budget_bytes()
    if not force_tiled and _fused_vmem_bytes(np_, dip, dop) <= budget:
        out_p = _sgc_fused(adj_p, x_p, w_p, b_p, k, feat.dtype, budget)
    else:
        tm = _pick_row_tile(np_, dip, dop, budget)
        out_p = _sgc_tiled(adj_p, x_p, w_p, b_p, k, feat.dtype, budget, tm)

    return out_p[:n, :d_out]


if __name__ == "__main__":
    # Small shapes consistent with SGC: 64-node graph, in_dim=32, out_dim=8, k=2.
    info_dict = {"in_dim": 32, "out_dim": 8, "n_layers": 2}
    n_nodes = 64
    n_edges = 256

    key = jax.random.PRNGKey(0)
    k_src, k_dst, k_feat, k_w, k_b = jax.random.split(key, 5)

    src = jax.random.randint(k_src, (n_edges,), 0, n_nodes)
    dst = jax.random.randint(k_dst, (n_edges,), 0, n_nodes)

    # Dense adjacency with multi-edge counts (matches DGL's message-sum):
    # A[i, j] = #edges j -> i (messages flow src -> dst).
    adj = jnp.zeros((n_nodes, n_nodes), jnp.float32).at[dst, src].add(1.0)
    in_deg = jnp.clip(adj.sum(axis=1), 1.0, None)
    norm = in_deg ** -0.5
    adj_norm = norm[:, None] * adj * norm[None, :]  # S = D^-1/2 A D^-1/2

    feat = jax.random.normal(k_feat, (n_nodes, info_dict["in_dim"]), jnp.float32)

    # Linear layer params (PyTorch nn.Linear default init); weight stored
    # pre-transposed as [in_dim, out_dim].
    bound = 1.0 / (info_dict["in_dim"] ** 0.5)
    w = jax.random.uniform(
        k_w, (info_dict["in_dim"], info_dict["out_dim"]), jnp.float32, -bound, bound
    )
    b = jax.random.uniform(k_b, (info_dict["out_dim"],), jnp.float32, -bound, bound)

    # Pure-JAX f32 reference following DGL SGConv's step-wise formulation.
    h = feat
    for _ in range(info_dict["n_layers"]):
        h = h * norm[:, None]
        h = adj @ h
        h = h * norm[:, None]
    ref = h @ w + b

    # Fast path: single fused VMEM-resident kernel (bf16 operands, f32 accum).
    out = sgc_forward(adj_norm, feat, w, b, info_dict["n_layers"])
    out = jax.block_until_ready(out)
    assert out.shape == (n_nodes, info_dict["out_dim"])
    assert jnp.allclose(out, ref, atol=3e-2, rtol=3e-2), float(
        jnp.max(jnp.abs(out - ref))
    )

    # Also exercise the row-tiled / S-streaming path used for large graphs.
    out_t = sgc_forward(
        adj_norm, feat, w, b, info_dict["n_layers"], force_tiled=True
    )
    out_t = jax.block_until_ready(out_t)
    assert jnp.allclose(out_t, ref, atol=3e-2, rtol=3e-2), float(
        jnp.max(jnp.abs(out_t - ref))
    )

    print("KERNEL_OK")
</pallas_src>

<mosaic_0001>
module attributes {stable_mosaic.version = 11 : i64} {
  func.func @_sgc_fused_kernel(%arg0: memref<128x128xbf16, #tpu.memory_space<vmem>>, %arg1: memref<128x128xbf16, #tpu.memory_space<vmem>>, %arg2: memref<128x128xbf16, #tpu.memory_space<vmem>>, %arg3: memref<1x128xf32, #tpu.memory_space<vmem>>, %arg4: memref<128x128xf32, #tpu.memory_space<vmem>>) attributes {dimension_semantics = [], scalar_prefetch = 0 : i64, scratch_operands = 0 : i64, tpu.core_type = #tpu.core_type<tc>} {
    %c0 = arith.constant 0 : index
    %c0_0 = arith.constant 0 : index
    %0 = vector.load %arg0[%c0, %c0_0] : memref<128x128xbf16, #tpu.memory_space<vmem>>, vector<128x128xbf16>
    %c0_1 = arith.constant 0 : index
    %c0_2 = arith.constant 0 : index
    %1 = vector.load %arg1[%c0_1, %c0_2] : memref<128x128xbf16, #tpu.memory_space<vmem>>, vector<128x128xbf16>
    %c0_3 = arith.constant 0 : index
    %c0_4 = arith.constant 0 : index
    %2 = vector.load %arg2[%c0_3, %c0_4] : memref<128x128xbf16, #tpu.memory_space<vmem>>, vector<128x128xbf16>
    %cst = arith.constant dense<0.000000e+00> : vector<128x128xf32>
    %3 = tpu.matmul %1, %2, %cst {dimension_numbers = #tpu.dot_dimension_numbers<[1], [0], [0], [1], [0, 0, 1, 1], [], []>} : vector<128x128xbf16>, vector<128x128xbf16>, vector<128x128xf32> -> vector<128x128xf32>
    %4 = arith.truncf %3 : vector<128x128xf32> to vector<128x128xbf16>
    %cst_5 = arith.constant dense<0.000000e+00> : vector<128x128xf32>
    %5 = tpu.matmul %0, %4, %cst_5 {dimension_numbers = #tpu.dot_dimension_numbers<[1], [0], [0], [1], [0, 0, 1, 1], [], []>} : vector<128x128xbf16>, vector<128x128xbf16>, vector<128x128xf32> -> vector<128x128xf32>
    %6 = arith.truncf %5 : vector<128x128xf32> to vector<128x128xbf16>
    %cst_6 = arith.constant dense<0.000000e+00> : vector<128x128xf32>
    %7 = tpu.matmul %0, %6, %cst_6 {dimension_numbers = #tpu.dot_dimension_numbers<[1], [0], [0], [1], [0, 0, 1, 1], [], []>} : vector<128x128xbf16>, vector<128x128xbf16>, vector<128x128xf32> -> vector<128x128xf32>
    %c0_7 = arith.constant 0 : index
    %c0_8 = arith.constant 0 : index
    %8 = vector.load %arg3[%c0_7, %c0_8] : memref<1x128xf32, #tpu.memory_space<vmem>>, vector<1x128xf32>
    %9 = vector.broadcast %8 : vector<1x128xf32> to vector<128x128xf32>
    %10 = arith.addf %7, %9 : vector<128x128xf32>
    %c0_9 = arith.constant 0 : index
    %c0_10 = arith.constant 0 : index
    %11 = vector.load %arg4[%c0_9, %c0_10] : memref<128x128xf32, #tpu.memory_space<vmem>>, vector<128x128xf32>
    tpu.vector_store %arg4[%c0_9, %c0_10], %10 {strides = array<i32>} : memref<128x128xf32, #tpu.memory_space<vmem>>, vector<128x128xf32>,
    return
  }
}

</mosaic_0001>

<llo_original>
// kernel: tpu_custom_call.1
$region0: #{tpu_custom_call.1}
  #allocation0 [shape = 'u32[]', space=smem, size = 0x4, offset = 0x4, fixed_abs, tag = 'smem constant byte address 0x4 - core index']
  #allocation1 [shape = 'u32[144,128]{1,0:T(1,128)}', space=vmem, size = 0x12000, scoped, tag = 'internal scratch']
  %s0 = inlined_call_operand.hbm [shape: bf16[128,128], index: 0, kind: input, shape index: {}]
  %s1 = inlined_call_operand.hbm [shape: bf16[128,128], index: 1, kind: input, shape index: {}]
  %s2 = inlined_call_operand.hbm [shape: bf16[128,128], index: 2, kind: input, shape index: {}]
  %s3 = inlined_call_operand.vmem [shape: f32[1,128], index: 3, kind: input, shape index: {}]
  %s4 = inlined_call_operand.hbm [shape: f32[128,128], index: 4, kind: output, shape index: {}]
  %s5 = sld [smem:[#allocation0]]
  $region38: #{tpu_custom_call.1} parent=0
    _
  %s7 = ssub.s32 1, %s5
  %s8 = scalar_select 0, %s7, %s5
  $region1: #{tpu_custom_call.1} parent=0
    #allocation2 [shape = 'u8[32768]{0}', space=vmem, size = 0x8000, scoped, tag = 'input window, operand 0, single buffered']
    #allocation3 [shape = 's32[1]{0}', space=sflag, size = 0x4, scoped, tag = 'scoped memory for tpu_custom_call.1']
    #allocation4 [shape = 's32[1]{0}', space=sflag, size = 0x4, scoped, tag = 'scoped memory for tpu_custom_call.1']
    #allocation5 [shape = 'u8[32768]{0}', space=vmem, size = 0x8000, scoped, tag = 'input window, operand 1, single buffered']
    #allocation6 [shape = 's32[1]{0}', space=sflag, size = 0x4, scoped, tag = 'scoped memory for tpu_custom_call.1']
    #allocation7 [shape = 'u8[32768]{0}', space=vmem, size = 0x8000, scoped, tag = 'input window, operand 2, single buffered']
    #allocation8 [shape = 'u8[65536]{0}', space=vmem, size = 0x10000, scoped, tag = 'output window, operand 0, single buffered']
    %9 = vsyncpa [#allocation3], 0
    %10 = vsyncpa [#allocation6], 0
    %11 = vsyncpa [#allocation4], 0
    // Predicated region
    $region2: #{tpu_custom_call.1} parent=1 // pred_check
      _
    $region3: #{tpu_custom_call.1} parent=1 // pred_check_branch
      %13 = sbr.rel (0) target = $region5
    $region4: #{tpu_custom_call.1} parent=1 // pred_region
      %s15 = ssub.s32 1024, 1024
      %16 = vsyncadd [#allocation3], %s15
      %s17 = sshll.u32 [#allocation2], 4
      %s18 = int_to_ptr.vmem [resolvable:$true] %s17
      %23 = dma.hbm_to_vmem [thread:$0]  %s0, 1024, %s18, [#allocation3], 64, 64, 4
    $region5: #{tpu_custom_call.1} parent=1 // pred_fallthru
      _
    // Predicated region
    $region6: #{tpu_custom_call.1} parent=1 // pred_check
      _
    $region7: #{tpu_custom_call.1} parent=1 // pred_check_branch
      %25 = sbr.rel (0) target = $region9
    $region8: #{tpu_custom_call.1} parent=1 // pred_region
      %s27 = ssub.s32 1024, 1024
      %28 = vsyncadd [#allocation6], %s27
      %s29 = sshll.u32 [#allocation5], 4
      %s30 = int_to_ptr.vmem [resolvable:$true] %s29
      %35 = dma.hbm_to_vmem [thread:$0]  %s1, 1024, %s30, [#allocation6], 64, 64, 4
    $region9: #{tpu_custom_call.1} parent=1 // pred_fallthru
      _
    // Predicated region
    $region10: #{tpu_custom_call.1} parent=1 // pred_check
      _
    $region11: #{tpu_custom_call.1} parent=1 // pred_check_branch
      %37 = sbr.rel (0) target = $region13
    $region12: #{tpu_custom_call.1} parent=1 // pred_region
      %s39 = ssub.s32 1024, 1024
      %40 = vsyncadd [#allocation6], %s39
      %s41 = sshll.u32 [#allocation7], 4
      %s42 = int_to_ptr.vmem [resolvable:$true] %s41
      %47 = dma.hbm_to_vmem [thread:$0]  %s2, 1024, %s42, [#allocation6], 64, 64, 4
    $region13: #{tpu_custom_call.1} parent=1 // pred_fallthru
      _
    // Predicated region
    $region14: #{tpu_custom_call.1} parent=1 // pred_check
      _
    $region15: #{tpu_custom_call.1} parent=1 // pred_check_branch
      %49 = sbr.rel (0) target = $region17
    $region16: #{tpu_custom_call.1} parent=1 // pred_region
      _
    $region17: #{tpu_custom_call.1} parent=1 // pred_fallthru
      _
    // Predicated region
    $region18: #{tpu_custom_call.1} parent=1 // pred_check
      _
    $region19: #{tpu_custom_call.1} parent=1 // pred_check_branch
      %51 = sbr.rel (0) target = $region21
    $region20: #{tpu_custom_call.1} parent=1 // pred_region
      %52 = dma.done [#allocation3], 1024
    $region21: #{tpu_custom_call.1} parent=1 // pred_fallthru
      _
    // Predicated region
    $region22: #{tpu_custom_call.1} parent=1 // pred_check
      _
    $region23: #{tpu_custom_call.1} parent=1 // pred_check_branch
      %54 = sbr.rel (0) target = $region25
    $region24: #{tpu_custom_call.1} parent=1 // pred_region
      %55 = dma.done [#allocation6], 1024
    $region25: #{tpu_custom_call.1} parent=1 // pred_fallthru
      _
    // Predicated region
    $region26: #{tpu_custom_call.1} parent=1 // pred_check
      _
    $region27: #{tpu_custom_call.1} parent=1 // pred_check_branch
      %57 = sbr.rel (0) target = $region29
    $region28: #{tpu_custom_call.1} parent=1 // pred_region
      %58 = dma.done [#allocation6], 1024
    $region29: #{tpu_custom_call.1} parent=1 // pred_fallthru
      _
    %v60 = vld [vmem:[#allocation2] sm:$0xf]
    %v61 = vld [vmem:[#allocation2 + $0x4] sm:$0xf]
    %v62 = vld [vmem:[#allocation2 + $0x8] sm:$0xf]
    %v63 = vld [vmem:[#allocation2 + $0xc] sm:$0xf]
    %v64 = vld [vmem:[#allocation2 + $0x10] sm:$0xf]
    %v65 = vld [vmem:[#allocation2 + $0x14] sm:$0xf]
    %v66 = vld [vmem:[#allocation2 + $0x18] sm:$0xf]
    %v67 = vld [vmem:[#allocation2 + $0x1c] sm:$0xf]
    %v68 = vld [vmem:[#allocation2 + $0x20] sm:$0xf]
    %v69 = vld [vmem:[#allocation2 + $0x24] sm:$0xf]
    %v70 = vld [vmem:[#allocation2 + $0x28] sm:$0xf]
    %v71 = vld [vmem:[#allocation2 + $0x2c] sm:$0xf]
    %v72 = vld [vmem:[#allocation2 + $0x30] sm:$0xf]
    %v73 = vld [vmem:[#allocation2 + $0x34] sm:$0xf]
    %v74 = vld [vmem:[#allocation2 + $0x38] sm:$0xf]
    %v75 = vld [vmem:[#allocation2 + $0x3c] sm:$0xf]
    %v76 = vld [vmem:[#allocation5] sm:$0xf]
    %v77 = vld [vmem:[#allocation5 + $0x4] sm:$0xf]
    %v78 = vld [vmem:[#allocation5 + $0x8] sm:$0xf]
    %v79 = vld [vmem:[#allocation5 + $0xc] sm:$0xf]
    %v80 = vld [vmem:[#allocation5 + $0x10] sm:$0xf]
    %v81 = vld [vmem:[#allocation5 + $0x14] sm:$0xf]
    %v82 = vld [vmem:[#allocation5 + $0x18] sm:$0xf]
    %v83 = vld [vmem:[#allocation5 + $0x1c] sm:$0xf]
    %v84 = vld [vmem:[#allocation5 + $0x20] sm:$0xf]
    %v85 = vld [vmem:[#allocation5 + $0x24] sm:$0xf]
    %v86 = vld [vmem:[#allocation5 + $0x28] sm:$0xf]
    %v87 = vld [vmem:[#allocation5 + $0x2c] sm:$0xf]
    %v88 = vld [vmem:[#allocation5 + $0x30] sm:$0xf]
    %v89 = vld [vmem:[#allocation5 + $0x34] sm:$0xf]
    %v90 = vld [vmem:[#allocation5 + $0x38] sm:$0xf]
    %v91 = vld [vmem:[#allocation5 + $0x3c] sm:$0xf]
    %v92 = vld [vmem:[#allocation7] sm:$0xf]
    %v93 = vld [vmem:[#allocation7 + $0x4] sm:$0xf]
    %v94 = vld [vmem:[#allocation7 + $0x8] sm:$0xf]
    %v95 = vld [vmem:[#allocation7 + $0xc] sm:$0xf]
    %v96 = vld [vmem:[#allocation7 + $0x10] sm:$0xf]
    %v97 = vld [vmem:[#allocation7 + $0x14] sm:$0xf]
    %v98 = vld [vmem:[#allocation7 + $0x18] sm:$0xf]
    %v99 = vld [vmem:[#allocation7 + $0x1c] sm:$0xf]
    %v100 = vld [vmem:[#allocation7 + $0x20] sm:$0xf]
    %v101 = vld [vmem:[#allocation7 + $0x24] sm:$0xf]
    %v102 = vld [vmem:[#allocation7 + $0x28] sm:$0xf]
    %v103 = vld [vmem:[#allocation7 + $0x2c] sm:$0xf]
    %v104 = vld [vmem:[#allocation7 + $0x30] sm:$0xf]
    %v105 = vld [vmem:[#allocation7 + $0x34] sm:$0xf]
    %v106 = vld [vmem:[#allocation7 + $0x38] sm:$0xf]
    %v107 = vld [vmem:[#allocation7 + $0x3c] sm:$0xf]
    %v124 = vunpack.c.l.b16 %v76
    %v125 = vunpack.c.l.b16 %v77
    %v126 = vunpack.c.l.b16 %v78
    %v127 = vunpack.c.l.b16 %v79
    %v128 = vunpack.c.l.b16 %v80
    %v129 = vunpack.c.l.b16 %v81
    %v130 = vunpack.c.l.b16 %v82
    %v131 = vunpack.c.l.b16 %v83
    %v132 = vunpack.c.l.b16 %v84
    %v133 = vunpack.c.l.b16 %v85
    %v134 = vunpack.c.l.b16 %v86
    %v135 = vunpack.c.l.b16 %v87
    %v136 = vunpack.c.l.b16 %v88
    %v137 = vunpack.c.l.b16 %v89
    %v138 = vunpack.c.l.b16 %v90
    %v139 = vunpack.c.l.b16 %v91
    %v140 = vpack.c.b16 %v125, %v124
    %v141 = vpack.c.b16 %v127, %v126
    %v142 = vpack.c.b16 %v129, %v128
    %v143 = vpack.c.b16 %v131, %v130
    %v144 = vpack.c.b16 %v133, %v132
    %v145 = vpack.c.b16 %v135, %v134
    %v146 = vpack.c.b16 %v137, %v136
    %v147 = vpack.c.b16 %v139, %v138
    %v172 = vunpack.c.l.b16 %v92
    %v173 = vunpack.c.l.b16 %v93
    %v174 = vunpack.c.l.b16 %v94
    %v175 = vunpack.c.l.b16 %v95
    %v176 = vunpack.c.l.b16 %v96
    %v177 = vunpack.c.l.b16 %v97
    %v178 = vunpack.c.l.b16 %v98
    %v179 = vunpack.c.l.b16 %v99
    %v180 = vunpack.c.l.b16 %v100
    %v181 = vunpack.c.l.b16 %v101
    %v182 = vunpack.c.l.b16 %v102
    %v183 = vunpack.c.l.b16 %v103
    %v184 = vunpack.c.l.b16 %v104
    %v185 = vunpack.c.l.b16 %v105
    %v186 = vunpack.c.l.b16 %v106
    %v187 = vunpack.c.l.b16 %v107
    %v188 = vpack.c.b16 %v173, %v172
    %v189 = vpack.c.b16 %v175, %v174
    %v190 = vpack.c.b16 %v177, %v176
    %v191 = vpack.c.b16 %v179, %v178
    %v192 = vpack.c.b16 %v181, %v180
    %v193 = vpack.c.b16 %v183, %v182
    %v194 = vpack.c.b16 %v185, %v184
    %v195 = vpack.c.b16 %v187, %v186
    %204 = vmatprep.subr.bf16.mxu0 0
    %205 = vmatpush1.bf16.msra.mxu0 %v188
    %206 = vmatprep.subr.bf16.mxu0 0
    %207 = vmatpush1.bf16.msra.mxu0 %v189
    %208 = vmatprep.subr.bf16.mxu0 0
    %209 = vmatpush1.bf16.msra.mxu0 %v190
    %210 = vmatprep.subr.bf16.mxu0 0
    %211 = vmatpush1.bf16.msra.mxu0 %v191
    %212 = vmatprep.subr.bf16.mxu0 0
    %213 = vmatpush1.bf16.msra.mxu0 %v192
    %214 = vmatprep.subr.bf16.mxu0 0
    %215 = vmatpush1.bf16.msra.mxu0 %v193
    %216 = vmatprep.subr.bf16.mxu0 0
    %217 = vmatpush1.bf16.msra.mxu0 %v194
    %218 = vmatprep.subr.bf16.mxu0 0
    %219 = vmatpush1.bf16.msra.mxu0 %v195
    %220 = vmatprep.subr.bf16.mxu0 0
    %221 = vmatpush1.bf16.msra.mxu0 0
    %222 = vmatprep.subr.bf16.mxu0 0
    %223 = vmatpush1.bf16.msra.mxu0 0
    %224 = vmatprep.subr.bf16.mxu0 0
    %225 = vmatpush1.bf16.msra.mxu0 0
    %226 = vmatprep.subr.bf16.mxu0 0
    %227 = vmatpush1.bf16.msra.mxu0 0
    %228 = vmatprep.subr.bf16.mxu0 0
    %229 = vmatpush1.bf16.msra.mxu0 0
    %230 = vmatprep.subr.bf16.mxu0 0
    %231 = vmatpush1.bf16.msra.mxu0 0
    %232 = vmatprep.subr.bf16.mxu0 0
    %233 = vmatpush1.bf16.msra.mxu0 0
    %234 = vmatprep.subr.bf16.mxu0 0
    %235 = vmatpush1.bf16.msra.mxu0 0
    %236 = vmatprep.mubr.bf16.mxu0 0
    %237 = vmatmul.mubr.bf16.gmra.mrb[0].mxu0 %v140
    %v238 = vpop.f32.mrb[0].mxu0
    %v239 = vadd.f32 0.0, %v238
    %v240 = vpop.f32.mrb[0].mxu0
    %v241 = vpop.f32.mrb[0].mxu0
    %v242 = vadd.f32 0.0, %v241
    %v243 = vpop.f32.mrb[0].mxu0
    %244 = vmatprep.mubr.bf16.mxu0 0
    %245 = vmatmul.mubr.bf16.gmra.mrb[0].mxu0 %v141
    %v246 = vpop.f32.mrb[0].mxu0
    %v247 = vadd.f32 0.0, %v246
    %v248 = vpop.f32.mrb[0].mxu0
    %v249 = vpop.f32.mrb[0].mxu0
    %v250 = vadd.f32 0.0, %v249
    %v251 = vpop.f32.mrb[0].mxu0
    %252 = vmatprep.mubr.bf16.mxu0 0
    %253 = vmatmul.mubr.bf16.gmra.mrb[0].mxu0 %v142
    %v254 = vpop.f32.mrb[0].mxu0
    %v255 = vadd.f32 0.0, %v254
    %v256 = vpop.f32.mrb[0].mxu0
    %v257 = vpop.f32.mrb[0].mxu0
    %v258 = vadd.f32 0.0, %v257
    %v259 = vpop.f32.mrb[0].mxu0
    %260 = vmatprep.mubr.bf16.mxu0 0
    %261 = vmatmul.mubr.bf16.gmra.mrb[0].mxu0 %v143
    %v262 = vpop.f32.mrb[0].mxu0
    %v263 = vadd.f32 0.0, %v262
    %v264 = vpop.f32.mrb[0].mxu0
    %v265 = vpop.f32.mrb[0].mxu0
    %v266 = vadd.f32 0.0, %v265
    %v267 = vpop.f32.mrb[0].mxu0
    %268 = vmatprep.mubr.bf16.mxu0 0
    %269 = vmatmul.mubr.bf16.gmra.mrb[0].mxu0 %v144
    %v270 = vpop.f32.mrb[0].mxu0
    %v271 = vadd.f32 0.0, %v270
    %v272 = vpop.f32.mrb[0].mxu0
    %v273 = vpop.f32.mrb[0].mxu0
    %v274 = vadd.f32 0.0, %v273
    %v275 = vpop.f32.mrb[0].mxu0
    %276 = vmatprep.mubr.bf16.mxu0 0
    %277 = vmatmul.mubr.bf16.gmra.mrb[0].mxu0 %v145
    %v278 = vpop.f32.mrb[0].mxu0
    %v279 = vadd.f32 0.0, %v278
    %v280 = vpop.f32.mrb[0].mxu0
    %v281 = vpop.f32.mrb[0].mxu0
    %v282 = vadd.f32 0.0, %v281
    %v283 = vpop.f32.mrb[0].mxu0
    %284 = vmatprep.mubr.bf16.mxu0 0
    %285 = vmatmul.mubr.bf16.gmra.mrb[0].mxu0 %v146
    %v286 = vpop.f32.mrb[0].mxu0
    %v287 = vadd.f32 0.0, %v286
    %v288 = vpop.f32.mrb[0].mxu0
    %v289 = vpop.f32.mrb[0].mxu0
    %v290 = vadd.f32 0.0, %v289
    %v291 = vpop.f32.mrb[0].mxu0
    %292 = vmatprep.mubr.bf16.mxu0 0
    %293 = vmatmul.mubr.bf16.gmra.mrb[0].mxu0 %v147
    %v294 = vpop.f32.mrb[0].mxu0
    %v295 = vadd.f32 0.0, %v294
    %v296 = vpop.f32.mrb[0].mxu0
    %v297 = vpop.f32.mrb[0].mxu0
    %v298 = vadd.f32 0.0, %v297
    %v299 = vpop.f32.mrb[0].mxu0
    %300 = vdwg.mxu0
    %v301 = vpack.c.bf16 %v242, %v239
    %v302 = vpack.c.bf16 %v250, %v247
    %v303 = vpack.c.bf16 %v258, %v255
    %v304 = vpack.c.bf16 %v266, %v263
    %v305 = vpack.c.bf16 %v274, %v271
    %v306 = vpack.c.bf16 %v282, %v279
    %v307 = vpack.c.bf16 %v290, %v287
    %v308 = vpack.c.bf16 %v298, %v295
    %v325 = vunpack.c.l.b16 %v60
    %v326 = vunpack.c.l.b16 %v61
    %v327 = vunpack.c.l.b16 %v62
    %v328 = vunpack.c.l.b16 %v63
    %v329 = vunpack.c.l.b16 %v64
    %v330 = vunpack.c.l.b16 %v65
    %v331 = vunpack.c.l.b16 %v66
    %v332 = vunpack.c.l.b16 %v67
    %v333 = vunpack.c.l.b16 %v68
    %v334 = vunpack.c.l.b16 %v69
    %v335 = vunpack.c.l.b16 %v70
    %v336 = vunpack.c.l.b16 %v71
    %v337 = vunpack.c.l.b16 %v72
    %v338 = vunpack.c.l.b16 %v73
    %v339 = vunpack.c.l.b16 %v74
    %v340 = vunpack.c.l.b16 %v75
    %v341 = vpack.c.b16 %v326, %v325
    %v342 = vpack.c.b16 %v328, %v327
    %v343 = vpack.c.b16 %v330, %v329
    %v344 = vpack.c.b16 %v332, %v331
    %v345 = vpack.c.b16 %v334, %v333
    %v346 = vpack.c.b16 %v336, %v335
    %v347 = vpack.c.b16 %v338, %v337
    %v348 = vpack.c.b16 %v340, %v339
    %357 = vmatprep.subr.bf16.mxu0 0
    %358 = vmatpush1.bf16.msra.mxu0 %v301
    %359 = vmatprep.subr.bf16.mxu0 0
    %360 = vmatpush1.bf16.msra.mxu0 %v302
    %361 = vmatprep.subr.bf16.mxu0 0
    %362 = vmatpush1.bf16.msra.mxu0 %v303
    %363 = vmatprep.subr.bf16.mxu0 0
    %364 = vmatpush1.bf16.msra.mxu0 %v304
    %365 = vmatprep.subr.bf16.mxu0 0
    %366 = vmatpush1.bf16.msra.mxu0 %v305
    %367 = vmatprep.subr.bf16.mxu0 0
    %368 = vmatpush1.bf16.msra.mxu0 %v306
    %369 = vmatprep.subr.bf16.mxu0 0
    %370 = vmatpush1.bf16.msra.mxu0 %v307
    %371 = vmatprep.subr.bf16.mxu0 0
    %372 = vmatpush1.bf16.msra.mxu0 %v308
    %373 = vmatprep.subr.bf16.mxu0 0
    %374 = vmatpush1.bf16.msra.mxu0 0
    %375 = vmatprep.subr.bf16.mxu0 0
    %376 = vmatpush1.bf16.msra.mxu0 0
    %377 = vmatprep.subr.bf16.mxu0 0
    %378 = vmatpush1.bf16.msra.mxu0 0
    %379 = vmatprep.subr.bf16.mxu0 0
    %380 = vmatpush1.bf16.msra.mxu0 0
    %381 = vmatprep.subr.bf16.mxu0 0
    %382 = vmatpush1.bf16.msra.mxu0 0
    %383 = vmatprep.subr.bf16.mxu0 0
    %384 = vmatpush1.bf16.msra.mxu0 0
    %385 = vmatprep.subr.bf16.mxu0 0
    %386 = vmatpush1.bf16.msra.mxu0 0
    %387 = vmatprep.subr.bf16.mxu0 0
    %388 = vmatpush1.bf16.msra.mxu0 0
    %389 = vmatprep.mubr.bf16.mxu0 0
    %390 = vmatmul.mubr.bf16.gmra.mrb[0].mxu0 %v341
    %v391 = vpop.f32.mrb[0].mxu0
    %v392 = vadd.f32 0.0, %v391
    %v393 = vpop.f32.mrb[0].mxu0
    %v394 = vpop.f32.mrb[0].mxu0
    %v395 = vadd.f32 0.0, %v394
    %v396 = vpop.f32.mrb[0].mxu0
    %397 = vmatprep.mubr.bf16.mxu0 0
    %398 = vmatmul.mubr.bf16.gmra.mrb[0].mxu0 %v342
    %v399 = vpop.f32.mrb[0].mxu0
    %v400 = vadd.f32 0.0, %v399
    %v401 = vpop.f32.mrb[0].mxu0
    %v402 = vpop.f32.mrb[0].mxu0
    %v403 = vadd.f32 0.0, %v402
    %v404 = vpop.f32.mrb[0].mxu0
    %405 = vmatprep.mubr.bf16.mxu0 0
    %406 = vmatmul.mubr.bf16.gmra.mrb[0].mxu0 %v343
    %v407 = vpop.f32.mrb[0].mxu0
    %v408 = vadd.f32 0.0, %v407
    %v409 = vpop.f32.mrb[0].mxu0
    %v410 = vpop.f32.mrb[0].mxu0
    %v411 = vadd.f32 0.0, %v410
    %v412 = vpop.f32.mrb[0].mxu0
    %413 = vmatprep.mubr.bf16.mxu0 0
    %414 = vmatmul.mubr.bf16.gmra.mrb[0].mxu0 %v344
    %v415 = vpop.f32.mrb[0].mxu0
    %v416 = vadd.f32 0.0, %v415
    %v417 = vpop.f32.mrb[0].mxu0
    %v418 = vpop.f32.mrb[0].mxu0
    %v419 = vadd.f32 0.0, %v418
    %v420 = vpop.f32.mrb[0].mxu0
    %421 = vmatprep.mubr.bf16.mxu0 0
    %422 = vmatmul.mubr.bf16.gmra.mrb[0].mxu0 %v345
    %v423 = vpop.f32.mrb[0].mxu0
    %v424 = vadd.f32 0.0, %v423
    %v425 = vpop.f32.mrb[0].mxu0
    %v426 = vpop.f32.mrb[0].mxu0
    %v427 = vadd.f32 0.0, %v426
    %v428 = vpop.f32.mrb[0].mxu0
    %429 = vmatprep.mubr.bf16.mxu0 0
    %430 = vmatmul.mubr.bf16.gmra.mrb[0].mxu0 %v346
    %v431 = vpop.f32.mrb[0].mxu0
    %v432 = vadd.f32 0.0, %v431
    %v433 = vpop.f32.mrb[0].mxu0
    %v434 = vpop.f32.mrb[0].mxu0
    %v435 = vadd.f32 0.0, %v434
    %v436 = vpop.f32.mrb[0].mxu0
    %437 = vmatprep.mubr.bf16.mxu0 0
    %438 = vmatmul.mubr.bf16.gmra.mrb[0].mxu0 %v347
    %v439 = vpop.f32.mrb[0].mxu0
    %v440 = vadd.f32 0.0, %v439
    %v441 = vpop.f32.mrb[0].mxu0
    %v442 = vpop.f32.mrb[0].mxu0
    %v443 = vadd.f32 0.0, %v442
    %v444 = vpop.f32.mrb[0].mxu0
    %445 = vmatprep.mubr.bf16.mxu0 0
    %446 = vmatmul.mubr.bf16.gmra.mrb[0].mxu0 %v348
    %v447 = vpop.f32.mrb[0].mxu0
    %v448 = vadd.f32 0.0, %v447
    %v449 = vpop.f32.mrb[0].mxu0
    %v450 = vpop.f32.mrb[0].mxu0
    %v451 = vadd.f32 0.0, %v450
    %v452 = vpop.f32.mrb[0].mxu0
    %453 = vdwg.mxu0
    %v454 = vpack.c.bf16 %v395, %v392
    %v455 = vpack.c.bf16 %v403, %v400
    %v456 = vpack.c.bf16 %v411, %v408
    %v457 = vpack.c.bf16 %v419, %v416
    %v458 = vpack.c.bf16 %v427, %v424
    %v459 = vpack.c.bf16 %v435, %v432
    %v460 = vpack.c.bf16 %v443, %v440
    %v461 = vpack.c.bf16 %v451, %v448
    %v462 = vld [vmem:[%s3] sm:$0x1]
    %v464 = vlaneseq
    %v465 = vshrl.u32 %v464, 7
    %v466 = vsub.s32 0, %v465
    %v467 = vrot.slane %v462, %v466
    %469 = vmatprep.subr.bf16.mxu0 0
    %470 = vmatpush1.bf16.msra.mxu0 %v454
    %471 = vmatprep.subr.bf16.mxu0 0
    %472 = vmatpush1.bf16.msra.mxu0 %v455
    %473 = vmatprep.subr.bf16.mxu0 0
    %474 = vmatpush1.bf16.msra.mxu0 %v456
    %475 = vmatprep.subr.bf16.mxu0 0
    %476 = vmatpush1.bf16.msra.mxu0 %v457
    %477 = vmatprep.subr.bf16.mxu0 0
    %478 = vmatpush1.bf16.msra.mxu0 %v458
    %479 = vmatprep.subr.bf16.mxu0 0
    %480 = vmatpush1.bf16.msra.mxu0 %v459
    %481 = vmatprep.subr.bf16.mxu0 0
    %482 = vmatpush1.bf16.msra.mxu0 %v460
    %483 = vmatprep.subr.bf16.mxu0 0
    %484 = vmatpush1.bf16.msra.mxu0 %v461
    %485 = vmatprep.subr.bf16.mxu0 0
    %486 = vmatpush1.bf16.msra.mxu0 0
    %487 = vmatprep.subr.bf16.mxu0 0
    %488 = vmatpush1.bf16.msra.mxu0 0
    %489 = vmatprep.subr.bf16.mxu0 0
    %490 = vmatpush1.bf16.msra.mxu0 0
    %491 = vmatprep.subr.bf16.mxu0 0
    %492 = vmatpush1.bf16.msra.mxu0 0
    %493 = vmatprep.subr.bf16.mxu0 0
    %494 = vmatpush1.bf16.msra.mxu0 0
    %495 = vmatprep.subr.bf16.mxu0 0
    %496 = vmatpush1.bf16.msra.mxu0 0
    %497 = vmatprep.subr.bf16.mxu0 0
    %498 = vmatpush1.bf16.msra.mxu0 0
    %499 = vmatprep.subr.bf16.mxu0 0
    %500 = vmatpush1.bf16.msra.mxu0 0
    %501 = vmatprep.mubr.bf16.mxu0 0
    %502 = vmatmul.mubr.bf16.gmra.mrb[0].mxu0 %v341
    %v503 = vpop.f32.mrb[0].mxu0
    %v504 = vadd.f32 %v467, %v503
    %v505 = vpop.f32.mrb[0].mxu0
    %v506 = vpop.f32.mrb[0].mxu0
    %v507 = vadd.f32 %v467, %v506
    %v508 = vpop.f32.mrb[0].mxu0
    %509 = vmatprep.mubr.bf16.mxu0 0
    %510 = vmatmul.mubr.bf16.gmra.mrb[0].mxu0 %v342
    %v511 = vpop.f32.mrb[0].mxu0
    %v512 = vadd.f32 %v467, %v511
    %v513 = vpop.f32.mrb[0].mxu0
    %v514 = vpop.f32.mrb[0].mxu0
    %v515 = vadd.f32 %v467, %v514
    %v516 = vpop.f32.mrb[0].mxu0
    %517 = vmatprep.mubr.bf16.mxu0 0
    %518 = vmatmul.mubr.bf16.gmra.mrb[0].mxu0 %v343
    %v519 = vpop.f32.mrb[0].mxu0
    %v520 = vadd.f32 %v467, %v519
    %v521 = vpop.f32.mrb[0].mxu0
    %v522 = vpop.f32.mrb[0].mxu0
    %v523 = vadd.f32 %v467, %v522
    %v524 = vpop.f32.mrb[0].mxu0
    %525 = vmatprep.mubr.bf16.mxu0 0
    %526 = vmatmul.mubr.bf16.gmra.mrb[0].mxu0 %v344
    %v527 = vpop.f32.mrb[0].mxu0
    %v528 = vadd.f32 %v467, %v527
    %v529 = vpop.f32.mrb[0].mxu0
    %v530 = vpop.f32.mrb[0].mxu0
    %v531 = vadd.f32 %v467, %v530
    %v532 = vpop.f32.mrb[0].mxu0
    %533 = vmatprep.mubr.bf16.mxu0 0
    %534 = vmatmul.mubr.bf16.gmra.mrb[0].mxu0 %v345
    %v535 = vpop.f32.mrb[0].mxu0
    %v536 = vadd.f32 %v467, %v535
    %v537 = vpop.f32.mrb[0].mxu0
    %v538 = vpop.f32.mrb[0].mxu0
    %v539 = vadd.f32 %v467, %v538
    %v540 = vpop.f32.mrb[0].mxu0
    %541 = vmatprep.mubr.bf16.mxu0 0
    %542 = vmatmul.mubr.bf16.gmra.mrb[0].mxu0 %v346
    %v543 = vpop.f32.mrb[0].mxu0
    %v544 = vadd.f32 %v467, %v543
    %v545 = vpop.f32.mrb[0].mxu0
    %v546 = vpop.f32.mrb[0].mxu0
    %v547 = vadd.f32 %v467, %v546
    %v548 = vpop.f32.mrb[0].mxu0
    %549 = vmatprep.mubr.bf16.mxu0 0
    %550 = vmatmul.mubr.bf16.gmra.mrb[0].mxu0 %v347
    %v551 = vpop.f32.mrb[0].mxu0
    %v552 = vadd.f32 %v467, %v551
    %v553 = vpop.f32.mrb[0].mxu0
    %v554 = vpop.f32.mrb[0].mxu0
    %v555 = vadd.f32 %v467, %v554
    %v556 = vpop.f32.mrb[0].mxu0
    %557 = vmatprep.mubr.bf16.mxu0 0
    %558 = vmatmul.mubr.bf16.gmra.mrb[0].mxu0 %v348
    %v559 = vpop.f32.mrb[0].mxu0
    %v560 = vadd.f32 %v467, %v559
    %v561 = vpop.f32.mrb[0].mxu0
    %v562 = vpop.f32.mrb[0].mxu0
    %v563 = vadd.f32 %v467, %v562
    %v564 = vpop.f32.mrb[0].mxu0
    %565 = vdwg.mxu0
    %566 = vst [vmem:[#allocation8] sm:$0xff] %v504
    %567 = vst [vmem:[#allocation8 + $0x8] sm:$0xff] %v507
    %568 = vst [vmem:[#allocation8 + $0x10] sm:$0xff] %v512
    %569 = vst [vmem:[#allocation8 + $0x18] sm:$0xff] %v515
    %570 = vst [vmem:[#allocation8 + $0x20] sm:$0xff] %v520
    %571 = vst [vmem:[#allocation8 + $0x28] sm:$0xff] %v523
    %572 = vst [vmem:[#allocation8 + $0x30] sm:$0xff] %v528
    %573 = vst [vmem:[#allocation8 + $0x38] sm:$0xff] %v531
    %574 = vst [vmem:[#allocation8 + $0x40] sm:$0xff] %v536
    %575 = vst [vmem:[#allocation8 + $0x48] sm:$0xff] %v539
    %576 = vst [vmem:[#allocation8 + $0x50] sm:$0xff] %v544
    %577 = vst [vmem:[#allocation8 + $0x58] sm:$0xff] %v547
    %578 = vst [vmem:[#allocation8 + $0x60] sm:$0xff] %v552
    %579 = vst [vmem:[#allocation8 + $0x68] sm:$0xff] %v555
    %580 = vst [vmem:[#allocation8 + $0x70] sm:$0xff] %v560
    %581 = vst [vmem:[#allocation8 + $0x78] sm:$0xff] %v563
    // Predicated region
    $region30: #{tpu_custom_call.1} parent=1 // pred_check
      _
    $region31: #{tpu_custom_call.1} parent=1 // pred_check_branch
      %583 = sbr.rel (0) target = $region33
    $region32: #{tpu_custom_call.1} parent=1 // pred_region
      %s585 = ssub.s32 2048, 2048
      %586 = vsyncadd [#allocation4], %s585
      %s587 = sshll.u32 [#allocation8], 4
      %s588 = int_to_ptr.vmem [resolvable:$true] %s587
      %593 = dma.vmem_to_hbm [thread:$0]  %s588, 2048, %s4, [#allocation4], 128, 128, 8
    $region33: #{tpu_custom_call.1} parent=1 // pred_fallthru
      _
    // Predicated region
    $region34: #{tpu_custom_call.1} parent=1 // pred_check
      _
    $region35: #{tpu_custom_call.1} parent=1 // pred_check_branch
      %595 = sbr.rel (0) target = $region37
    $region36: #{tpu_custom_call.1} parent=1 // pred_region
      %596 = dma.done [#allocation4], 2048
    $region37: #{tpu_custom_call.1} parent=1 // pred_fallthru
      _
    %597 = vsyncpa [#allocation3], 1
    %598 = vsyncpa [#allocation6], 1
    %599 = vsyncpa [#allocation4], 1

</llo_original>
